<compile_context>
chip_gen: v5e
topology: v5e:2x2
jax: 0.10.0
libtpu: 0.0.40
codegen_flags: <defaults>
</compile_context>

<pallas_src>
import functools

import jax
import jax.numpy as jnp
from jax.experimental import pallas as pl
from jax.experimental.pallas import tpu as pltpu

BN_EPS = 1e-5
_BF16 = 2
_F32 = 4


def _round_up(x, m):
    return (x + m - 1) // m * m


def _fc4_padded_cols(num_points):
    """fc4 output columns after tile padding (shared by prep + forward)."""
    n_out = num_points * 3
    mult = 512 if n_out >= 512 else 128
    return _round_up(n_out, mult)


def _vmem_budget_bytes():
    """Generation-aware scoped-VMEM budget: 3/4 of per-core capacity
    (~48 MiB on v7x, ~96 MiB on v5e/v6e); conservative fallback otherwise."""
    try:
        cap = int(pltpu.get_tpu_info().vmem_capacity_bytes)
    except Exception:
        cap = 64 << 20
    return (cap // 4) * 3


# Feature-detect single-buffered (constant-index) BlockSpecs.
try:
    _ = pl.BlockSpec((8, 128), lambda i: (0, 0), pipeline_mode=pl.Buffered(1))
    _HAS_BUFFERED1 = True
except Exception:  # pragma: no cover - older jax without pipeline_mode
    _HAS_BUFFERED1 = False


def _single_buffer_kwargs():
    return {"pipeline_mode": pl.Buffered(1)} if _HAS_BUFFERED1 else {}


def _fc_relu_bf16(h_bf16, w_ref, b_ref):
    # bf16 x bf16 matmul on the MXU with f32 accumulation; bias/ReLU in f32.
    y = jnp.dot(h_bf16, w_ref[...], preferred_element_type=jnp.float32)
    y = y + b_ref[...]
    return jnp.maximum(y, 0.0).astype(jnp.bfloat16)


def _decoder_kernel_resident(x_ref,
                             w1_ref, b1_ref, w2_ref, b2_ref, w3_ref, b3_ref,
                             w4_ref, b4_ref, out_ref):
    # All weights VMEM-resident; one fused fc1..fc4 chain per batch tile.
    h = x_ref[...]                                   # already bf16
    h = _fc_relu_bf16(h, w1_ref, b1_ref)
    h = _fc_relu_bf16(h, w2_ref, b2_ref)
    h = _fc_relu_bf16(h, w3_ref, b3_ref)
    y = jnp.dot(h, w4_ref[...], preferred_element_type=jnp.float32) + b4_ref[...]
    out_ref[...] = jnp.tanh(y).astype(out_ref.dtype)


def _decoder_kernel_coltiled(x_ref,
                             w1_ref, b1_ref, w2_ref, b2_ref, w3_ref, b3_ref,
                             w4_ref, b4_ref, out_ref, h3_ref):
    # Fallback for very large num_points: fc4 column-tiled.  The trunk only
    # depends on the batch tile, so compute it at the first column tile and
    # reuse the VMEM scratch.  NOTE: correct only while the column axis is the
    # innermost, sequentially executed ("arbitrary") grid axis.
    @pl.when(pl.program_id(1) == 0)
    def _():
        h = x_ref[...]
        h = _fc_relu_bf16(h, w1_ref, b1_ref)
        h = _fc_relu_bf16(h, w2_ref, b2_ref)
        h3_ref[...] = _fc_relu_bf16(h, w3_ref, b3_ref)

    y = jnp.dot(h3_ref[...], w4_ref[...], preferred_element_type=jnp.float32)
    y = y + b4_ref[...]
    out_ref[...] = jnp.tanh(y).astype(out_ref.dtype)


def prepare_params(params, *, num_points):
    """One-time parameter transform:
      - fold eval-mode BN (running stats) into fc1..fc3: W' = W*s, b' = (b-mean)*s+beta
      - permute fc4 columns to interleaved (x0,y0,z0,...) so the final
        view/transpose becomes a plain reshape
      - pad fc4 columns to a lane/tile-dense multiple (512, or 128 for tiny nets)
      - cast weights to bf16 (MXU inputs), keep biases f32
    """
    prepared = {}
    for i in ("1", "2", "3"):
        w = params[f"fc{i}"]["w"]
        b = params[f"fc{i}"]["b"]
        bn = params[f"bn{i}"]
        scale = bn["gamma"] * jax.lax.rsqrt(bn["var"] + BN_EPS)      # (1, Cout)
        prepared[f"w{i}"] = (w * scale).astype(jnp.bfloat16)
        prepared[f"b{i}"] = ((b - bn["mean"]) * scale + bn["beta"]).astype(jnp.float32)

    w4 = params["fc4"]["w"]
    b4 = params["fc4"]["b"]
    n_out = num_points * 3
    # Column permutation so out[b, n*3 + c] == y_orig[b, c*num_points + n].
    cols = jnp.arange(n_out, dtype=jnp.int32)
    perm = (cols % 3) * num_points + cols // 3
    w4 = w4[:, perm]
    b4 = b4[:, perm]
    n_pad = _fc4_padded_cols(num_points)
    if n_pad != n_out:
        w4 = jnp.pad(w4, ((0, 0), (0, n_pad - n_out)))
        b4 = jnp.pad(b4, ((0, 0), (0, n_pad - n_out)))
    prepared["w4"] = w4.astype(jnp.bfloat16)
    prepared["b4"] = b4.astype(jnp.float32)
    return prepared


def point_decoder_forward(x, prepared, *, num_points, batch_tile=256):
    """x: (B, bottleneck) f32. Returns (B, num_points, 3) f32."""
    B, c_in = x.shape
    c1 = prepared["w1"].shape[1]
    c2 = prepared["w2"].shape[1]
    c3 = prepared["w3"].shape[1]
    n_out = num_points * 3
    n_pad = prepared["w4"].shape[1]

    # Batch tile: feed the MXU (multiple of 16 for bf16 sublanes); for
    # realistic batches ensure >= 2 batch tiles so the "parallel" batch axis
    # can be split across v7x's two TensorCores (harmless on 1-TC chips).
    tm = min(batch_tile, _round_up(B, 16))
    if B >= 32 and _round_up(B, tm) // tm < 2:
        tm = _round_up((B + 1) // 2, 16)
    b_pad = _round_up(B, tm)

    x = x.astype(jnp.bfloat16)                       # halve x HBM/VMEM traffic
    if b_pad != B:
        x = jnp.pad(x, ((0, b_pad - B), (0, 0)))

    budget = _vmem_budget_bytes()
    trunk_bytes = (c_in * c1 + c1 * c2 + c2 * c3) * _BF16 + (c1 + c2 + c3) * _F32
    x_tile_bytes = 2 * tm * c_in * _BF16             # double-buffered x tile
    resident_bytes = (trunk_bytes
                      + c3 * n_pad * _BF16 + n_pad * _F32     # resident W4/b4
                      + x_tile_bytes
                      + 2 * tm * n_pad * _F32                 # dbl-buffered out
                      + tm * n_pad * _F32)                    # f32 accumulator
    use_resident = resident_bytes <= budget

    if use_resident:
        grid = (b_pad // tm,)

        def res(shape):
            # Constant index_map -> VMEM-resident, single-buffered.
            return pl.BlockSpec(shape, lambda i: (0, 0), **_single_buffer_kwargs())

        in_specs = [
            pl.BlockSpec((tm, c_in), lambda i: (i, 0)),      # x : batch-tiled
            res((c_in, c1)), res((1, c1)),                   # fc1 (BN folded)
            res((c1, c2)), res((1, c2)),                     # fc2 (BN folded)
            res((c2, c3)), res((1, c3)),                     # fc3 (BN folded)
            res((c3, n_pad)), res((1, n_pad)),               # fc4 : resident
        ]
        out_spec = pl.BlockSpec((tm, n_pad), lambda i: (i, 0))
        scratch_shapes = []
        kernel = _decoder_kernel_resident
        dim_sem = ("parallel",)
        est_bytes = resident_bytes
    else:
        # fc4 too big to keep resident: column-tile it (n_pad is a multiple of
        # 512 whenever n_out >= 512, so tiles stay 512 wide).
        tn = 512 if n_pad % 512 == 0 else 128
        grid = (b_pad // tm, n_pad // tn)

        def res(shape):
            return pl.BlockSpec(shape, lambda i, j: (0, 0), **_single_buffer_kwargs())

        in_specs = [
            pl.BlockSpec((tm, c_in), lambda i, j: (i, 0)),   # x : batch-tiled
            res((c_in, c1)), res((1, c1)),
            res((c1, c2)), res((1, c2)),
            res((c2, c3)), res((1, c3)),
            pl.BlockSpec((c3, tn), lambda i, j: (0, j)),     # fc4 W : col-tiled
            pl.BlockSpec((1, tn), lambda i, j: (0, j)),      # fc4 b : col-tiled
        ]
        out_spec = pl.BlockSpec((tm, tn), lambda i, j: (i, j))
        scratch_shapes = [pltpu.VMEM((tm, c3), jnp.bfloat16)]
        kernel = _decoder_kernel_coltiled
        dim_sem = ("parallel", "arbitrary")
        est_bytes = (trunk_bytes + x_tile_bytes
                     + 2 * (c3 * tn * _BF16 + tn * _F32)
                     + 3 * tm * tn * _F32
                     + tm * c3 * _BF16)

    vmem_limit = int(min(budget, max(est_bytes + (8 << 20), 16 << 20)))

    out_pad = pl.pallas_call(
        kernel,
        out_shape=jax.ShapeDtypeStruct((b_pad, n_pad), jnp.float32),
        grid_spec=pltpu.PrefetchScalarGridSpec(
            num_scalar_prefetch=0,
            grid=grid,
            in_specs=in_specs,
            out_specs=out_spec,
            scratch_shapes=scratch_shapes,
        ),
        compiler_params=pltpu.CompilerParams(
            dimension_semantics=dim_sem,
            vmem_limit_bytes=vmem_limit,
        ),
    )(
        x,
        prepared["w1"], prepared["b1"],
        prepared["w2"], prepared["b2"],
        prepared["w3"], prepared["b3"],
        prepared["w4"], prepared["b4"],
    )

    # fc4 columns were pre-permuted to (x0,y0,z0, x1,...), so PyTorch's
    # view(B,3,N).transpose(1,2) is just a cheap slice + reshape here.
    return out_pad[:B, :n_out].reshape(B, num_points, 3)


def init_params(key, bottleneck_size, num_points):
    """Deterministic synthetic parameters matching the PyTorch module's shapes
    (weights pre-transposed to (in_features, out_features))."""
    dims = [
        (bottleneck_size, bottleneck_size),             # fc1
        (bottleneck_size, bottleneck_size // 2),        # fc2
        (bottleneck_size // 2, bottleneck_size // 4),   # fc3
        (bottleneck_size // 4, num_points * 3),         # fc4
    ]
    params = {}
    keys = jax.random.split(key, 16)
    ki = 0
    for i, (cin, cout) in enumerate(dims, start=1):
        scale = 1.0 / jnp.sqrt(jnp.float32(cin))
        w = jax.random.uniform(keys[ki], (cin, cout), jnp.float32, -scale, scale); ki += 1
        b = jax.random.uniform(keys[ki], (1, cout), jnp.float32, -scale, scale); ki += 1
        params[f"fc{i}"] = {"w": w, "b": b}
        if i <= 3:
            gamma = 1.0 + 0.1 * jax.random.normal(keys[ki], (1, cout), jnp.float32); ki += 1
            beta = 0.1 * jax.random.normal(keys[ki], (1, cout), jnp.float32); ki += 1
            mean = 0.05 * jnp.arange(cout, dtype=jnp.float32).reshape(1, cout) / cout
            var = 1.0 + 0.02 * jnp.arange(cout, dtype=jnp.float32).reshape(1, cout) / cout
            params[f"bn{i}"] = {"gamma": gamma, "beta": beta, "mean": mean, "var": var}
    return params


def reference_forward_f32(x, params, *, num_points):
    """Full-precision pure-JAX reference with the original module semantics."""
    h = x
    for i in ("1", "2", "3"):
        p, bn = params["fc" + i], params["bn" + i]
        y = h @ p["w"] + p["b"]
        y = (y - bn["mean"]) * (bn["gamma"] / jnp.sqrt(bn["var"] + BN_EPS)) + bn["beta"]
        h = jnp.maximum(y, 0.0)
    y = jnp.tanh(h @ params["fc4"]["w"] + params["fc4"]["b"])
    B = x.shape[0]
    return jnp.transpose(y.reshape(B, 3, num_points), (0, 2, 1))


def reference_forward_bf16(x, prepared, *, num_points):
    """Reference using the same folded / bf16-cast / column-permuted params."""
    h = x.astype(jnp.bfloat16)
    for i in ("1", "2", "3"):
        y = h.astype(jnp.float32) @ prepared[f"w{i}"].astype(jnp.float32) + prepared[f"b{i}"]
        h = jnp.maximum(y, 0.0).astype(jnp.bfloat16)
    y = h.astype(jnp.float32) @ prepared["w4"].astype(jnp.float32) + prepared["b4"]
    y = jnp.tanh(y)[:, : num_points * 3]
    return y.reshape(x.shape[0], num_points, 3)


if __name__ == "__main__":
    # Small shapes consistent with the module: batch=2, bottleneck=32, num_points=8
    BATCH = 2
    BOTTLENECK = 32
    NUM_POINTS = 8

    key = jax.random.PRNGKey(0)
    kx, kp = jax.random.split(key)
    x = jax.random.normal(kx, (BATCH, BOTTLENECK), jnp.float32)
    params = init_params(kp, BOTTLENECK, NUM_POINTS)

    prepared = prepare_params(params, num_points=NUM_POINTS)   # one-time transform
    fwd = jax.jit(functools.partial(point_decoder_forward, num_points=NUM_POINTS))
    out = fwd(x, prepared)
    jax.block_until_ready(out)

    assert out.shape == (BATCH, NUM_POINTS, 3), out.shape

    # Exact-structure check vs a reference using the same folded bf16 params.
    ref_bf16 = reference_forward_bf16(x, prepared, num_points=NUM_POINTS)
    assert jnp.allclose(out, ref_bf16, atol=1e-3, rtol=1e-3), "mismatch vs bf16 reference"

    # Loose sanity check vs the full-precision original semantics.
    ref_f32 = reference_forward_f32(x, params, num_points=NUM_POINTS)
    assert jnp.allclose(out, ref_f32, atol=7.5e-2, rtol=7.5e-2), "mismatch vs f32 reference"

    print("KERNEL_OK")
</pallas_src>

<mosaic_0001>
module attributes {stable_mosaic.version = 11 : i64} {
  func.func @_decoder_kernel_resident(%arg0: i32, %arg1: memref<16x32xbf16, #tpu.memory_space<vmem>>, %arg2: memref<32x32xbf16, #tpu.memory_space<vmem>>, %arg3: memref<1x32xf32, #tpu.memory_space<vmem>>, %arg4: memref<32x16xbf16, #tpu.memory_space<vmem>>, %arg5: memref<1x16xf32, #tpu.memory_space<vmem>>, %arg6: memref<16x8xbf16, #tpu.memory_space<vmem>>, %arg7: memref<1x8xf32, #tpu.memory_space<vmem>>, %arg8: memref<8x128xbf16, #tpu.memory_space<vmem>>, %arg9: memref<1x128xf32, #tpu.memory_space<vmem>>, %arg10: memref<16x128xf32, #tpu.memory_space<vmem>>) attributes {dimension_semantics = [#tpu.dimension_semantics<parallel>], iteration_bounds = array<i64: 1>, scalar_prefetch = 0 : i64, scratch_operands = 0 : i64, tpu.core_type = #tpu.core_type<tc>, window_params = [{transform_indices = @transform_0, window_bounds = array<i64: 16, 32>}, {pipeline_mode = #tpu.pipeline_mode<synchronous>, transform_indices = @transform_1, window_bounds = array<i64: 32, 32>}, {pipeline_mode = #tpu.pipeline_mode<synchronous>, transform_indices = @transform_2, window_bounds = array<i64: 1, 32>}, {pipeline_mode = #tpu.pipeline_mode<synchronous>, transform_indices = @transform_3, window_bounds = array<i64: 32, 16>}, {pipeline_mode = #tpu.pipeline_mode<synchronous>, transform_indices = @transform_4, window_bounds = array<i64: 1, 16>}, {pipeline_mode = #tpu.pipeline_mode<synchronous>, transform_indices = @transform_5, window_bounds = array<i64: 16, 8>}, {pipeline_mode = #tpu.pipeline_mode<synchronous>, transform_indices = @transform_6, window_bounds = array<i64: 1, 8>}, {pipeline_mode = #tpu.pipeline_mode<synchronous>, transform_indices = @transform_7, window_bounds = array<i64: 8, 128>}, {pipeline_mode = #tpu.pipeline_mode<synchronous>, transform_indices = @transform_8, window_bounds = array<i64: 1, 128>}, {transform_indices = @transform_9, window_bounds = array<i64: 16, 128>}]} {
    %c0 = arith.constant 0 : index
    %c0_0 = arith.constant 0 : index
    %0 = vector.load %arg1[%c0, %c0_0] : memref<16x32xbf16, #tpu.memory_space<vmem>>, vector<16x32xbf16>
    %c0_1 = arith.constant 0 : index
    %c0_2 = arith.constant 0 : index
    %1 = vector.load %arg2[%c0_1, %c0_2] : memref<32x32xbf16, #tpu.memory_space<vmem>>, vector<32x32xbf16>
    %cst = arith.constant dense<0.000000e+00> : vector<16x32xf32>
    %2 = tpu.matmul %0, %1, %cst {dimension_numbers = #tpu.dot_dimension_numbers<[1], [0], [0], [1], [0, 0, 1, 1], [], []>} : vector<16x32xbf16>, vector<32x32xbf16>, vector<16x32xf32> -> vector<16x32xf32>
    %c0_3 = arith.constant 0 : index
    %c0_4 = arith.constant 0 : index
    %3 = vector.load %arg3[%c0_3, %c0_4] : memref<1x32xf32, #tpu.memory_space<vmem>>, vector<1x32xf32>
    %4 = vector.broadcast %3 : vector<1x32xf32> to vector<16x32xf32>
    %5 = arith.addf %2, %4 : vector<16x32xf32>
    %cst_5 = arith.constant 0.000000e+00 : f32
    %6 = vector.broadcast %cst_5 : f32 to vector<16x32xf32>
    %7 = arith.maximumf %5, %6 : vector<16x32xf32>
    %8 = arith.truncf %7 : vector<16x32xf32> to vector<16x32xbf16>
    %c0_6 = arith.constant 0 : index
    %c0_7 = arith.constant 0 : index
    %9 = vector.load %arg4[%c0_6, %c0_7] : memref<32x16xbf16, #tpu.memory_space<vmem>>, vector<32x16xbf16>
    %cst_8 = arith.constant dense<0.000000e+00> : vector<16x16xf32>
    %10 = tpu.matmul %8, %9, %cst_8 {dimension_numbers = #tpu.dot_dimension_numbers<[1], [0], [0], [1], [0, 0, 1, 1], [], []>} : vector<16x32xbf16>, vector<32x16xbf16>, vector<16x16xf32> -> vector<16x16xf32>
    %c0_9 = arith.constant 0 : index
    %c0_10 = arith.constant 0 : index
    %11 = vector.load %arg5[%c0_9, %c0_10] : memref<1x16xf32, #tpu.memory_space<vmem>>, vector<1x16xf32>
    %12 = vector.broadcast %11 : vector<1x16xf32> to vector<16x16xf32>
    %13 = arith.addf %10, %12 : vector<16x16xf32>
    %cst_11 = arith.constant 0.000000e+00 : f32
    %14 = vector.broadcast %cst_11 : f32 to vector<16x16xf32>
    %15 = arith.maximumf %13, %14 : vector<16x16xf32>
    %16 = arith.truncf %15 : vector<16x16xf32> to vector<16x16xbf16>
    %c0_12 = arith.constant 0 : index
    %c0_13 = arith.constant 0 : index
    %17 = vector.load %arg6[%c0_12, %c0_13] : memref<16x8xbf16, #tpu.memory_space<vmem>>, vector<16x8xbf16>
    %cst_14 = arith.constant dense<0.000000e+00> : vector<16x8xf32>
    %18 = tpu.matmul %16, %17, %cst_14 {dimension_numbers = #tpu.dot_dimension_numbers<[1], [0], [0], [1], [0, 0, 1, 1], [], []>} : vector<16x16xbf16>, vector<16x8xbf16>, vector<16x8xf32> -> vector<16x8xf32>
    %c0_15 = arith.constant 0 : index
    %c0_16 = arith.constant 0 : index
    %19 = vector.load %arg7[%c0_15, %c0_16] : memref<1x8xf32, #tpu.memory_space<vmem>>, vector<1x8xf32>
    %20 = vector.broadcast %19 : vector<1x8xf32> to vector<16x8xf32>
    %21 = arith.addf %18, %20 : vector<16x8xf32>
    %cst_17 = arith.constant 0.000000e+00 : f32
    %22 = vector.broadcast %cst_17 : f32 to vector<16x8xf32>
    %23 = arith.maximumf %21, %22 : vector<16x8xf32>
    %24 = arith.truncf %23 : vector<16x8xf32> to vector<16x8xbf16>
    %c0_18 = arith.constant 0 : index
    %c0_19 = arith.constant 0 : index
    %25 = vector.load %arg8[%c0_18, %c0_19] : memref<8x128xbf16, #tpu.memory_space<vmem>>, vector<8x128xbf16>
    %cst_20 = arith.constant dense<0.000000e+00> : vector<16x128xf32>
    %26 = tpu.matmul %24, %25, %cst_20 {dimension_numbers = #tpu.dot_dimension_numbers<[1], [0], [0], [1], [0, 0, 1, 1], [], []>} : vector<16x8xbf16>, vector<8x128xbf16>, vector<16x128xf32> -> vector<16x128xf32>
    %c0_21 = arith.constant 0 : index
    %c0_22 = arith.constant 0 : index
    %27 = vector.load %arg9[%c0_21, %c0_22] : memref<1x128xf32, #tpu.memory_space<vmem>>, vector<1x128xf32>
    %28 = vector.broadcast %27 : vector<1x128xf32> to vector<16x128xf32>
    %29 = arith.addf %26, %28 : vector<16x128xf32>
    %30 = math.tanh %29 : vector<16x128xf32>
    %c0_23 = arith.constant 0 : index
    %c0_24 = arith.constant 0 : index
    %31 = vector.load %arg10[%c0_23, %c0_24] : memref<16x128xf32, #tpu.memory_space<vmem>>, vector<16x128xf32>
    tpu.vector_store %arg10[%c0_23, %c0_24], %30 {strides = array<i32>} : memref<16x128xf32, #tpu.memory_space<vmem>>, vector<16x128xf32>,
    return
  }
  func.func @transform_0(%arg0: i32) -> (i32, i32) {
    %c0_i32 = arith.constant 0 : i32
    %c0_i32_0 = arith.constant 0 : i32
    return %arg0, %c0_i32 : i32, i32
  }
  func.func @transform_1(%arg0: i32) -> (i32, i32) {
    %c0_i32 = arith.constant 0 : i32
    %c0_i32_0 = arith.constant 0 : i32
    %c0_i32_1 = arith.constant 0 : i32
    return %c0_i32, %c0_i32_0 : i32, i32
  }
  func.func @transform_2(%arg0: i32) -> (i32, i32) {
    %c0_i32 = arith.constant 0 : i32
    %c0_i32_0 = arith.constant 0 : i32
    %c0_i32_1 = arith.constant 0 : i32
    return %c0_i32, %c0_i32_0 : i32, i32
  }
  func.func @transform_3(%arg0: i32) -> (i32, i32) {
    %c0_i32 = arith.constant 0 : i32
    %c0_i32_0 = arith.constant 0 : i32
    %c0_i32_1 = arith.constant 0 : i32
    return %c0_i32, %c0_i32_0 : i32, i32
  }
  func.func @transform_4(%arg0: i32) -> (i32, i32) {
    %c0_i32 = arith.constant 0 : i32
    %c0_i32_0 = arith.constant 0 : i32
    %c0_i32_1 = arith.constant 0 : i32
    return %c0_i32, %c0_i32_0 : i32, i32
  }
  func.func @transform_5(%arg0: i32) -> (i32, i32) {
    %c0_i32 = arith.constant 0 : i32
    %c0_i32_0 = arith.constant 0 : i32
    %c0_i32_1 = arith.constant 0 : i32
    return %c0_i32, %c0_i32_0 : i32, i32
  }
  func.func @transform_6(%arg0: i32) -> (i32, i32) {
    %c0_i32 = arith.constant 0 : i32
    %c0_i32_0 = arith.constant 0 : i32
    %c0_i32_1 = arith.constant 0 : i32
    return %c0_i32, %c0_i32_0 : i32, i32
  }
  func.func @transform_7(%arg0: i32) -> (i32, i32) {
    %c0_i32 = arith.constant 0 : i32
    %c0_i32_0 = arith.constant 0 : i32
    %c0_i32_1 = arith.constant 0 : i32
    return %c0_i32, %c0_i32_0 : i32, i32
  }
  func.func @transform_8(%arg0: i32) -> (i32, i32) {
    %c0_i32 = arith.constant 0 : i32
    %c0_i32_0 = arith.constant 0 : i32
    %c0_i32_1 = arith.constant 0 : i32
    return %c0_i32, %c0_i32_0 : i32, i32
  }
  func.func @transform_9(%arg0: i32) -> (i32, i32) {
    %c0_i32 = arith.constant 0 : i32
    %c0_i32_0 = arith.constant 0 : i32
    return %arg0, %c0_i32 : i32, i32
  }
}

</mosaic_0001>

<llo_original>
// kernel: point_decoder_forward.1
$region0: #{point_decoder_forward.1}
  #allocation0 [shape = 'u32[]', space=smem, size = 0x4, offset = 0x4, fixed_abs, tag = 'smem constant byte address 0x4 - core index']
  #allocation1 [shape = 'u32[72,128]{1,0:T(1,128)}', space=vmem, size = 0x9000, scoped, tag = 'internal scratch']
  %s0 = inlined_call_operand.vmem [shape: bf16[16,32], index: 0, kind: input, shape index: {}]
  %s1 = inlined_call_operand.vmem [shape: bf16[32,32], index: 1, kind: input, shape index: {}]
  %s2 = inlined_call_operand.vmem [shape: f32[1,32], index: 2, kind: input, shape index: {}]
  %s3 = inlined_call_operand.vmem [shape: bf16[32,16], index: 3, kind: input, shape index: {}]
  %s4 = inlined_call_operand.vmem [shape: f32[1,16], index: 4, kind: input, shape index: {}]
  %s5 = inlined_call_operand.vmem [shape: bf16[16,8], index: 5, kind: input, shape index: {}]
  %s6 = inlined_call_operand.vmem [shape: f32[1,8], index: 6, kind: input, shape index: {}]
  %s7 = inlined_call_operand.vmem [shape: bf16[8,128], index: 7, kind: input, shape index: {}]
  %s8 = inlined_call_operand.vmem [shape: f32[1,128], index: 8, kind: input, shape index: {}]
  %s9 = inlined_call_operand.vmem [shape: f32[16,128], index: 9, kind: output, shape index: {}]
  %s10 = sld [smem:[#allocation0]]
  $region46: #{point_decoder_forward.1} parent=0
    _
  %s12 = ssub.s32 1, %s10
  %s13 = scalar_select 0, %s12, %s10
  // Predicated region
  $region2: #{point_decoder_forward.1} parent=0 // pred_check
    _
  $region3: #{point_decoder_forward.1} parent=0 // pred_check_branch
    %15 = sbr.rel (0) target = $region5
  $region4: #{point_decoder_forward.1} parent=0 // pred_region
    _
  $region5: #{point_decoder_forward.1} parent=0 // pred_fallthru
    _
  // Predicated region
  $region6: #{point_decoder_forward.1} parent=0 // pred_check
    _
  $region7: #{point_decoder_forward.1} parent=0 // pred_check_branch
    %17 = sbr.rel (0) target = $region9
  $region8: #{point_decoder_forward.1} parent=0 // pred_region
    _
  $region9: #{point_decoder_forward.1} parent=0 // pred_fallthru
    _
  // Predicated region
  $region10: #{point_decoder_forward.1} parent=0 // pred_check
    _
  $region11: #{point_decoder_forward.1} parent=0 // pred_check_branch
    %19 = sbr.rel (0) target = $region13
  $region12: #{point_decoder_forward.1} parent=0 // pred_region
    _
  $region13: #{point_decoder_forward.1} parent=0 // pred_fallthru
    _
  // Predicated region
  $region14: #{point_decoder_forward.1} parent=0 // pred_check
    _
  $region15: #{point_decoder_forward.1} parent=0 // pred_check_branch
    %21 = sbr.rel (0) target = $region17
  $region16: #{point_decoder_forward.1} parent=0 // pred_region
    _
  $region17: #{point_decoder_forward.1} parent=0 // pred_fallthru
    _
  // Predicated region
  $region18: #{point_decoder_forward.1} parent=0 // pred_check
    _
  $region19: #{point_decoder_forward.1} parent=0 // pred_check_branch
    %23 = sbr.rel (0) target = $region21
  $region20: #{point_decoder_forward.1} parent=0 // pred_region
    _
  $region21: #{point_decoder_forward.1} parent=0 // pred_fallthru
    _
  // Predicated region
  $region22: #{point_decoder_forward.1} parent=0 // pred_check
    _
  $region23: #{point_decoder_forward.1} parent=0 // pred_check_branch
    %25 = sbr.rel (0) target = $region25
  $region24: #{point_decoder_forward.1} parent=0 // pred_region
    _
  $region25: #{point_decoder_forward.1} parent=0 // pred_fallthru
    _
  // Predicated region
  $region26: #{point_decoder_forward.1} parent=0 // pred_check
    _
  $region27: #{point_decoder_forward.1} parent=0 // pred_check_branch
    %27 = sbr.rel (0) target = $region29
  $region28: #{point_decoder_forward.1} parent=0 // pred_region
    _
  $region29: #{point_decoder_forward.1} parent=0 // pred_fallthru
    _
  // Predicated region
  $region30: #{point_decoder_forward.1} parent=0 // pred_check
    _
  $region31: #{point_decoder_forward.1} parent=0 // pred_check_branch
    %29 = sbr.rel (0) target = $region33
  $region32: #{point_decoder_forward.1} parent=0 // pred_region
    _
  $region33: #{point_decoder_forward.1} parent=0 // pred_fallthru
    _
  // Predicated region
  $region34: #{point_decoder_forward.1} parent=0 // pred_check
    _
  $region35: #{point_decoder_forward.1} parent=0 // pred_check_branch
    %31 = sbr.rel (0) target = $region37
  $region36: #{point_decoder_forward.1} parent=0 // pred_region
    _
  $region37: #{point_decoder_forward.1} parent=0 // pred_fallthru
    _
  %v33 = vld [vmem:[%s0] sm:$0xf]
  %v34 = vld [vmem:[%s0 + $0x4] sm:$0xf]
  %v35 = vld [vmem:[%s1] sm:$0xf]
  %v36 = vld [vmem:[%s1 + $0x4] sm:$0xf]
  %v37 = vld [vmem:[%s1 + $0x8] sm:$0xf]
  %v38 = vld [vmem:[%s1 + $0xc] sm:$0xf]
  %v39 = vld [vmem:[%s2] sm:$0x1]
  %v41 = vperm.slane %v39, 0
  %v45 = vunpack.c.l.b16 %v33
  %v46 = vunpack.c.l.b16 %v34
  %v47 = vpack.c.b16 %v46, %v45
  %v52 = vunpack.c.l.b16 %v35
  %v53 = vunpack.c.l.b16 %v36
  %v54 = vunpack.c.l.b16 %v37
  %v55 = vunpack.c.l.b16 %v38
  %v56 = vpack.c.b16 %v53, %v52
  %v57 = vpack.c.b16 %v55, %v54
  %vm60 = vcmask 261120
  %v62 = vsel %vm60, %v47, 0
  %64 = vmatpush.bf16.msra.mxu0 0
  %65 = vmatpush.bf16.msra.mxu0 0
  %66 = vmatpush.bf16.msra.mxu0 0
  %67 = vmatpush.bf16.msra.mxu0 0
  %68 = vmatpush.bf16.msra.mxu0 0
  %69 = vmatpush.bf16.msra.mxu0 0
  %70 = vmatpush.bf16.msra.mxu0 %v57
  %71 = vmatpush.bf16.msra.mxu0 %v56
  %72 = vmatmul.bf16.gmra.mxu0 %v62
  %v73 = vpop.f32.mrf.mxu0
  %v74 = vadd.f32 %v41, %v73
  %v75 = vpop.f32.mrf.mxu0
  %v76 = vadd.f32 %v41, %v75
  %77 = vdwg.mxu0
  %v78 = vmax.f32 %v74, 0.0
  %v79 = vmax.f32 %v76, 0.0
  %v80 = vpack.c.bf16 %v79, %v78
  %v81 = vld [vmem:[%s3] sm:$0xf]
  %v82 = vld [vmem:[%s3 + $0x4] sm:$0xf]
  %v83 = vld [vmem:[%s3 + $0x8] sm:$0xf]
  %v84 = vld [vmem:[%s3 + $0xc] sm:$0xf]
  %v85 = vld [vmem:[%s4] sm:$0x1]
  %v87 = vperm.slane %v85, 0
  %v93 = vunpack.c.l.b16 %v81
  %v94 = vunpack.c.l.b16 %v82
  %v95 = vunpack.c.l.b16 %v83
  %v96 = vunpack.c.l.b16 %v84
  %v97 = vpack.c.b16 %v94, %v93
  %v98 = vpack.c.b16 %v96, %v95
  %v102 = vsel %vm60, %v80, 0
  %104 = vmatpush.bf16.msra.mxu0 0
  %105 = vmatpush.bf16.msra.mxu0 0
  %106 = vmatpush.bf16.msra.mxu0 0
  %107 = vmatpush.bf16.msra.mxu0 0
  %108 = vmatpush.bf16.msra.mxu0 0
  %109 = vmatpush.bf16.msra.mxu0 0
  %110 = vmatpush.bf16.msra.mxu0 %v98
  %111 = vmatpush.bf16.msra.mxu0 %v97
  %112 = vmatmul.bf16.gmra.mxu0 %v102
  %v113 = vpop.f32.mrf.mxu0
  %v114 = vadd.f32 %v87, %v113
  %v115 = vpop.f32.mrf.mxu0
  %v116 = vadd.f32 %v87, %v115
  %117 = vdwg.mxu0
  %v118 = vmax.f32 %v114, 0.0
  %v119 = vmax.f32 %v116, 0.0
  %v120 = vpack.c.bf16 %v119, %v118
  %v121 = vld [vmem:[%s5] sm:$0xf]
  %v122 = vld [vmem:[%s5 + $0x4] sm:$0xf]
  %v123 = vld [vmem:[%s6] sm:$0x1]
  %v125 = vperm.slane %v123, 0
  %v129 = vunpack.c.l.b16 %v121
  %v130 = vunpack.c.l.b16 %v122
  %v131 = vpack.c.b16 %v130, %v129
  %vm133 = vcmask 130048
  %v135 = vsel %vm133, %v120, 0
  %137 = vmatpush.bf16.msra.mxu0 0
  %138 = vmatpush.bf16.msra.mxu0 0
  %139 = vmatpush.bf16.msra.mxu0 0
  %140 = vmatpush.bf16.msra.mxu0 0
  %141 = vmatpush.bf16.msra.mxu0 0
  %142 = vmatpush.bf16.msra.mxu0 0
  %143 = vmatpush.bf16.msra.mxu0 0
  %144 = vmatpush.bf16.msra.mxu0 %v131
  %145 = vmatmul.bf16.gmra.mxu0 %v135
  %v146 = vpop.f32.mrf.mxu0
  %v147 = vadd.f32 %v125, %v146
  %v148 = vpop.f32.mrf.mxu0
  %v149 = vadd.f32 %v125, %v148
  %150 = vdwg.mxu0
  %v151 = vmax.f32 %v147, 0.0
  %v152 = vmax.f32 %v149, 0.0
  %v153 = vpack.c.bf16 %v152, %v151
  %v154 = vld [vmem:[%s7] sm:$0xf]
  %v155 = vld [vmem:[%s8] sm:$0x1]
  %v157 = vperm.slane %v155, 0
  %vm159 = vcmask 64512
  %v161 = vsel %vm159, %v153, 0
  %vm163 = vcmask 1043456
  %v165 = vsel %vm163, %v154, 0
  %167 = vmatpush.bf16.msra.mxu0 0
  %168 = vmatpush.bf16.msra.mxu0 0
  %169 = vmatpush.bf16.msra.mxu0 0
  %170 = vmatpush.bf16.msra.mxu0 0
  %171 = vmatpush.bf16.msra.mxu0 0
  %172 = vmatpush.bf16.msra.mxu0 0
  %173 = vmatpush.bf16.msra.mxu0 0
  %174 = vmatpush.bf16.msra.mxu0 %v165
  %175 = vmatmul.bf16.gmra.mxu0 %v161
  %v176 = vpop.f32.mrf.mxu0
  %v177 = vadd.f32 %v157, %v176
  %v178 = vpop.f32.mrf.mxu0
  %v179 = vadd.f32 %v157, %v178
  %180 = vdwg.mxu0
  %v181 = vtanh.pop %v177
  %v182 = vtanh.pop %v179
  %183 = vst [vmem:[%s9] sm:$0xff] %v181
  %184 = vst [vmem:[%s9 + $0x8] sm:$0xff] %v182
  // Predicated region
  $region38: #{point_decoder_forward.1} parent=0 // pred_check
    _
  $region39: #{point_decoder_forward.1} parent=0 // pred_check_branch
    %186 = sbr.rel (0) target = $region41
  $region40: #{point_decoder_forward.1} parent=0 // pred_region
    _
  $region41: #{point_decoder_forward.1} parent=0 // pred_fallthru
    _
  // Predicated region
  $region42: #{point_decoder_forward.1} parent=0 // pred_check
    _
  $region43: #{point_decoder_forward.1} parent=0 // pred_check_branch
    %188 = sbr.rel (0) target = $region45
  $region44: #{point_decoder_forward.1} parent=0 // pred_region
    _
  $region45: #{point_decoder_forward.1} parent=0 // pred_fallthru
    _

</llo_original>
